<compile_context>
chip_gen: v6e
topology: v6e:2x2x1
jax: 0.10.0
libtpu: 0.0.40
codegen_flags: <defaults>
</compile_context>

<pallas_src>
import functools
import math

import jax
import jax.numpy as jnp
from jax.experimental import pallas as pl
from jax.experimental.pallas import tpu as pltpu

# Vocabulary sizes of the fixed temporal embeddings (TemporalEmbedding).
_MINUTE, _HOUR, _WEEKDAY, _DAY, _MONTH = 4, 24, 7, 32, 13


def _sinusoidal_table(n, d_model):
    """FixedEmbedding / PositionalEmbedding weight (sin on even, cos on odd cols)."""
    pos = jnp.arange(n, dtype=jnp.float32)[:, None]
    div = jnp.exp(jnp.arange(0, d_model, 2, dtype=jnp.float32)
                  * -(math.log(10000.0) / d_model))
    tab = jnp.zeros((n, d_model), jnp.float32)
    tab = tab.at[:, 0::2].set(jnp.sin(pos * div))
    tab = tab.at[:, 1::2].set(jnp.cos(pos * div))
    return tab


def data_embedding_kernel(*refs, num_marks):
    """One (batch-block, d_model-tile) step: out = x3 @ Wc [+ multihot(marks) @ We] + pe."""
    if num_marks:
        x3_ref, mark_ref, wc_ref, we_ref, pe_ref, out_ref = refs
    else:
        x3_ref, wc_ref, pe_ref, out_ref = refs

    bb, t, k3 = x3_ref.shape
    dn = out_ref.shape[-1]
    m = bb * t

    # Conv taps were assembled wrapper-side (lane-dense bf16 slab); the body is a
    # lane-dense MXU matmul with M = Bb*T and f32 accumulation.
    lhs = x3_ref[...].reshape(m, k3)                       # bf16 (M, 3*c_in)
    acc = jnp.dot(lhs, wc_ref[...], preferred_element_type=jnp.float32)

    if num_marks:
        v = we_ref.shape[0]
        # Multi-hot of the offset-shifted time marks: the 4-5 fixed-table lookups
        # become one extra K-pass on the MXU.  Build in int32/f32 (v5e VPU has no
        # bf16); cast to bf16 only at the dot operand (0/1 values are exact).
        marks = mark_ref[...].reshape(m, num_marks)        # int32, offsets pre-added
        cols = jax.lax.broadcasted_iota(jnp.int32, (m, v), 1)
        mh = jnp.zeros((m, v), jnp.float32)
        for c in range(num_marks):
            mh = mh + (cols == marks[:, c:c + 1]).astype(jnp.float32)
        acc = acc + jnp.dot(mh.astype(jnp.bfloat16), we_ref[...],
                            preferred_element_type=jnp.float32)

    # + PositionalEmbedding (f32); Dropout in eval mode is identity.
    out = acc.reshape(bb, t, dn) + pe_ref[...][None, :, :]
    out_ref[...] = out.astype(out_ref.dtype)


def data_embedding_forward(x, x_mark, conv_w, *, d_model, freq='h',
                           batch_block=8, n_block=512):
    """x: (B, T, c_in); x_mark: (B, T, n_marks) int or None;
    conv_w: PyTorch Conv1d weight, shape (d_model, c_in, 3)."""
    B, T, C = x.shape
    assert conv_w.shape == (d_model, C, 3)
    assert T % 8 == 0, "seq_len must be a multiple of 8 (layout-free reshapes)"

    # --- temporal-feature layout ---------------------------------------------
    if x_mark is None:
        feats = []
    else:
        feats = [(0, _MONTH), (1, _DAY), (2, _WEEKDAY), (3, _HOUR)]
        if freq == 't':
            feats.append((4, _MINUTE))
    num_marks = len(feats)
    vocab_total = sum(v for _, v in feats)

    # --- wrapper-side LHS assembly: circular conv taps (layout plumbing) -------
    xf = x.astype(jnp.float32)
    x3 = jnp.concatenate(
        [jnp.roll(xf, 1, axis=1), xf, jnp.roll(xf, -1, axis=1)],
        axis=-1).astype(jnp.bfloat16)                                  # (B, T, 3C)

    # --- packed weights: bf16 at the MXU, d_model padded lane-dense ------------
    d_pad = ((d_model + 127) // 128) * 128
    pad_n = ((0, 0), (0, d_pad - d_model))
    w_conv = jnp.concatenate([conv_w[:, :, k].T for k in range(3)], axis=0)
    w_conv = jnp.pad(w_conv.astype(jnp.float32), pad_n).astype(jnp.bfloat16)  # (3C, Dp)
    pe = jnp.pad(_sinusoidal_table(T, d_model), pad_n)                 # f32 (T, Dp)

    inputs = [x3]
    if num_marks:
        offsets, tot = [], 0
        for _, v in feats:
            offsets.append(tot)
            tot += v
        # Out-of-range marks contribute nothing (multi-hot drops them) instead of
        # erroring like nn.Embedding would.
        marks = (x_mark[..., :num_marks].astype(jnp.int32)
                 + jnp.asarray(offsets, jnp.int32))                    # (B, T, nm)
        w_emb = jnp.concatenate(
            [_sinusoidal_table(v, d_model) for _, v in feats], axis=0)
        w_emb = jnp.pad(w_emb, pad_n).astype(jnp.bfloat16)             # (V, Dp)
        inputs.append(marks)
    inputs.append(w_conv)
    if num_marks:
        inputs.append(w_emb)
    inputs.append(pe)

    # --- grid: batch blocks x d_model tiles, both parallel ---------------------
    bb = max(1, min(batch_block, B))
    while B % bb:
        bb -= 1
    dn = max(128, (min(n_block, d_pad) // 128) * 128)
    while d_pad % dn:
        dn -= 128
    grid = (B // bb, d_pad // dn)

    in_specs = [pl.BlockSpec((bb, T, 3 * C), lambda b, n: (b, 0, 0))]
    if num_marks:
        in_specs.append(pl.BlockSpec((bb, T, num_marks), lambda b, n: (b, 0, 0)))
    in_specs.append(pl.BlockSpec((3 * C, dn), lambda b, n: (0, n)))
    if num_marks:
        in_specs.append(pl.BlockSpec((vocab_total, dn), lambda b, n: (0, n)))
    in_specs.append(pl.BlockSpec((T, dn), lambda b, n: (0, n)))
    out_spec = pl.BlockSpec((bb, T, dn), lambda b, n: (b, 0, n))

    # Raise the scoped-VMEM limit only when the double-buffered per-step footprint
    # would exceed the ~32 MiB default (matters for large Bb / T / d_model).
    step_bytes = (bb * T * 3 * C * 2 + bb * T * num_marks * 4
                  + 3 * C * dn * 2 + vocab_total * dn * 2
                  + T * dn * 4 + bb * T * dn * 4)
    vmem_limit = None
    if 2 * step_bytes > (24 << 20):
        vmem_limit = int(min(2 * step_bytes + (16 << 20), 96 << 20))

    kdim = 3 * C + vocab_total
    cost = pl.CostEstimate(
        flops=2 * B * T * kdim * d_pad,
        transcendentals=0,
        bytes_accessed=int(sum(a.size * a.dtype.itemsize for a in inputs)
                           + B * T * d_pad * 4),
    )

    out = pl.pallas_call(
        functools.partial(data_embedding_kernel, num_marks=num_marks),
        out_shape=jax.ShapeDtypeStruct((B, T, d_pad), jnp.float32),
        grid_spec=pltpu.PrefetchScalarGridSpec(
            num_scalar_prefetch=0,
            grid=grid,
            in_specs=in_specs,
            out_specs=out_spec,
        ),
        compiler_params=pltpu.CompilerParams(
            dimension_semantics=("parallel", "parallel"),
            vmem_limit_bytes=vmem_limit),
        cost_estimate=cost,
    )(*inputs)

    return out[..., :d_model] if d_pad != d_model else out


def data_embedding_reference(x, x_mark, conv_w, *, d_model, freq='h'):
    """Pure-JAX f32 reference using a different formulation (pad+einsum, direct gathers)."""
    B, T, C = x.shape
    xp = jnp.pad(x, ((0, 0), (1, 1), (0, 0)), mode='wrap')              # circular pad
    windows = jnp.stack([xp[:, k:k + T, :] for k in range(3)], axis=2)  # (B,T,3,C)
    tok = jnp.einsum('btkc,ock->bto', windows, conv_w)

    out = tok + _sinusoidal_table(T, d_model)[None]
    if x_mark is not None:
        feats = [(0, _MONTH), (1, _DAY), (2, _WEEKDAY), (3, _HOUR)]
        if freq == 't':
            feats.append((4, _MINUTE))
        for col, vocab in feats:
            out = out + _sinusoidal_table(vocab, d_model)[x_mark[:, :, col]]
    return out


if __name__ == "__main__":
    # Small shapes: batch=4, seq_len=16, c_in=4, d_model=32, freq='h' (4 marks).
    B, T, C, D = 4, 16, 4, 32
    key = jax.random.PRNGKey(0)
    kx, kw, km = jax.random.split(key, 3)

    x = jax.random.normal(kx, (B, T, C), dtype=jnp.float32)
    kms = jax.random.split(km, 4)
    x_mark = jnp.concatenate([
        jax.random.randint(kms[0], (B, T, 1), 0, _MONTH),
        jax.random.randint(kms[1], (B, T, 1), 0, _DAY),
        jax.random.randint(kms[2], (B, T, 1), 0, _WEEKDAY),
        jax.random.randint(kms[3], (B, T, 1), 0, _HOUR),
    ], axis=-1).astype(jnp.int32)
    conv_w = (0.1 * jax.random.normal(kw, (D, C, 3))).astype(jnp.float32)

    # batch_block=2 so the batch grid axis actually iterates in the demo.
    out = data_embedding_forward(x, x_mark, conv_w, d_model=D, freq='h', batch_block=2)
    out = jax.block_until_ready(out)
    ref = data_embedding_reference(x, x_mark, conv_w, d_model=D, freq='h')
    assert out.shape == (B, T, D)
    # Tolerance loosened vs f32 reference because MXU operands are bf16.
    assert jnp.allclose(out, ref, atol=3e-2, rtol=3e-2), "mismatch vs reference (marks)"

    # x_mark=None branch (no mark DMA stream, no temporal dot).
    out2 = data_embedding_forward(x, None, conv_w, d_model=D, freq='h', batch_block=2)
    out2 = jax.block_until_ready(out2)
    ref2 = data_embedding_reference(x, None, conv_w, d_model=D, freq='h')
    assert out2.shape == (B, T, D)
    assert jnp.allclose(out2, ref2, atol=3e-2, rtol=3e-2), "mismatch vs reference (no marks)"

    print("KERNEL_OK")
</pallas_src>

<mosaic_0001>
module attributes {stable_mosaic.version = 11 : i64} {
  func.func @data_embedding_kernel(%arg0: i32, %arg1: i32, %arg2: memref<2x16x12xbf16, #tpu.memory_space<vmem>>, %arg3: memref<2x16x4xi32, #tpu.memory_space<vmem>>, %arg4: memref<12x128xbf16, #tpu.memory_space<vmem>>, %arg5: memref<76x128xbf16, #tpu.memory_space<vmem>>, %arg6: memref<16x128xf32, #tpu.memory_space<vmem>>, %arg7: memref<2x16x128xf32, #tpu.memory_space<vmem>>) attributes {dimension_semantics = [#tpu.dimension_semantics<parallel>, #tpu.dimension_semantics<parallel>], iteration_bounds = array<i64: 2, 1>, scalar_prefetch = 0 : i64, scratch_operands = 0 : i64, tpu.core_type = #tpu.core_type<tc>, window_params = [{transform_indices = @transform_0, window_bounds = array<i64: 2, 16, 12>}, {transform_indices = @transform_1, window_bounds = array<i64: 2, 16, 4>}, {transform_indices = @transform_2, window_bounds = array<i64: 12, 128>}, {transform_indices = @transform_3, window_bounds = array<i64: 76, 128>}, {transform_indices = @transform_4, window_bounds = array<i64: 16, 128>}, {transform_indices = @transform_5, window_bounds = array<i64: 2, 16, 128>}]} {
    %c0 = arith.constant 0 : index
    %c0_0 = arith.constant 0 : index
    %c0_1 = arith.constant 0 : index
    %0 = vector.load %arg2[%c0, %c0_0, %c0_1] : memref<2x16x12xbf16, #tpu.memory_space<vmem>>, vector<2x16x12xbf16>
    %1 = vector.shape_cast %0 : vector<2x16x12xbf16> to vector<32x12xbf16>
    %c0_2 = arith.constant 0 : index
    %c0_3 = arith.constant 0 : index
    %2 = vector.load %arg4[%c0_2, %c0_3] : memref<12x128xbf16, #tpu.memory_space<vmem>>, vector<12x128xbf16>
    %cst = arith.constant dense<0.000000e+00> : vector<32x128xf32>
    %3 = tpu.matmul %1, %2, %cst {dimension_numbers = #tpu.dot_dimension_numbers<[1], [0], [0], [1], [0, 0, 1, 1], [], []>} : vector<32x12xbf16>, vector<12x128xbf16>, vector<32x128xf32> -> vector<32x128xf32>
    %c0_4 = arith.constant 0 : index
    %c0_5 = arith.constant 0 : index
    %c0_6 = arith.constant 0 : index
    %4 = vector.load %arg3[%c0_4, %c0_5, %c0_6] : memref<2x16x4xi32, #tpu.memory_space<vmem>>, vector<2x16x4xi32>
    %5 = vector.shape_cast %4 : vector<2x16x4xi32> to vector<32x4xi32>
    %6 = tpu.iota {dimensions = array<i32: 1>} : vector<32x76xi32>
    %cst_7 = arith.constant 0.000000e+00 : f32
    %7 = vector.broadcast %cst_7 : f32 to vector<32x76xf32>
    %8 = vector.extract_strided_slice %5 {offsets = [0, 0], sizes = [32, 1], strides = [1, 1]} : vector<32x4xi32> to vector<32x1xi32>
    %9 = vector.broadcast %8 : vector<32x1xi32> to vector<32x76xi32>
    %10 = arith.cmpi eq, %6, %9 : vector<32x76xi32>
    %11 = arith.extui %10 : vector<32x76xi1> to vector<32x76xi32>
    %12 = arith.sitofp %11 : vector<32x76xi32> to vector<32x76xf32>
    %13 = arith.addf %7, %12 : vector<32x76xf32>
    %14 = vector.extract_strided_slice %5 {offsets = [0, 1], sizes = [32, 1], strides = [1, 1]} : vector<32x4xi32> to vector<32x1xi32>
    %15 = vector.broadcast %14 : vector<32x1xi32> to vector<32x76xi32>
    %16 = arith.cmpi eq, %6, %15 : vector<32x76xi32>
    %17 = arith.extui %16 : vector<32x76xi1> to vector<32x76xi32>
    %18 = arith.sitofp %17 : vector<32x76xi32> to vector<32x76xf32>
    %19 = arith.addf %13, %18 : vector<32x76xf32>
    %20 = vector.extract_strided_slice %5 {offsets = [0, 2], sizes = [32, 1], strides = [1, 1]} : vector<32x4xi32> to vector<32x1xi32>
    %21 = vector.broadcast %20 : vector<32x1xi32> to vector<32x76xi32>
    %22 = arith.cmpi eq, %6, %21 : vector<32x76xi32>
    %23 = arith.extui %22 : vector<32x76xi1> to vector<32x76xi32>
    %24 = arith.sitofp %23 : vector<32x76xi32> to vector<32x76xf32>
    %25 = arith.addf %19, %24 : vector<32x76xf32>
    %26 = vector.extract_strided_slice %5 {offsets = [0, 3], sizes = [32, 1], strides = [1, 1]} : vector<32x4xi32> to vector<32x1xi32>
    %27 = vector.broadcast %26 : vector<32x1xi32> to vector<32x76xi32>
    %28 = arith.cmpi eq, %6, %27 : vector<32x76xi32>
    %29 = arith.extui %28 : vector<32x76xi1> to vector<32x76xi32>
    %30 = arith.sitofp %29 : vector<32x76xi32> to vector<32x76xf32>
    %31 = arith.addf %25, %30 : vector<32x76xf32>
    %32 = arith.truncf %31 : vector<32x76xf32> to vector<32x76xbf16>
    %c0_8 = arith.constant 0 : index
    %c0_9 = arith.constant 0 : index
    %33 = vector.load %arg5[%c0_8, %c0_9] : memref<76x128xbf16, #tpu.memory_space<vmem>>, vector<76x128xbf16>
    %cst_10 = arith.constant dense<0.000000e+00> : vector<32x128xf32>
    %34 = tpu.matmul %32, %33, %cst_10 {dimension_numbers = #tpu.dot_dimension_numbers<[1], [0], [0], [1], [0, 0, 1, 1], [], []>} : vector<32x76xbf16>, vector<76x128xbf16>, vector<32x128xf32> -> vector<32x128xf32>
    %35 = arith.addf %3, %34 : vector<32x128xf32>
    %36 = vector.shape_cast %35 : vector<32x128xf32> to vector<2x16x128xf32>
    %c0_11 = arith.constant 0 : index
    %c0_12 = arith.constant 0 : index
    %37 = vector.load %arg6[%c0_11, %c0_12] : memref<16x128xf32, #tpu.memory_space<vmem>>, vector<16x128xf32>
    %38 = vector.shape_cast %37 : vector<16x128xf32> to vector<1x16x128xf32>
    %39 = vector.broadcast %38 : vector<1x16x128xf32> to vector<2x16x128xf32>
    %40 = arith.addf %36, %39 : vector<2x16x128xf32>
    %c0_13 = arith.constant 0 : index
    %c0_14 = arith.constant 0 : index
    %c0_15 = arith.constant 0 : index
    %41 = vector.load %arg7[%c0_13, %c0_14, %c0_15] : memref<2x16x128xf32, #tpu.memory_space<vmem>>, vector<2x16x128xf32>
    tpu.vector_store %arg7[%c0_13, %c0_14, %c0_15], %40 {strides = array<i32>} : memref<2x16x128xf32, #tpu.memory_space<vmem>>, vector<2x16x128xf32>,
    return
  }
  func.func @transform_0(%arg0: i32, %arg1: i32) -> (i32, i32, i32) {
    %c0_i32 = arith.constant 0 : i32
    %c0_i32_0 = arith.constant 0 : i32
    %c0_i32_1 = arith.constant 0 : i32
    return %arg0, %c0_i32, %c0_i32_0 : i32, i32, i32
  }
  func.func @transform_1(%arg0: i32, %arg1: i32) -> (i32, i32, i32) {
    %c0_i32 = arith.constant 0 : i32
    %c0_i32_0 = arith.constant 0 : i32
    %c0_i32_1 = arith.constant 0 : i32
    return %arg0, %c0_i32, %c0_i32_0 : i32, i32, i32
  }
  func.func @transform_2(%arg0: i32, %arg1: i32) -> (i32, i32) {
    %c0_i32 = arith.constant 0 : i32
    %c0_i32_0 = arith.constant 0 : i32
    return %c0_i32, %arg1 : i32, i32
  }
  func.func @transform_3(%arg0: i32, %arg1: i32) -> (i32, i32) {
    %c0_i32 = arith.constant 0 : i32
    %c0_i32_0 = arith.constant 0 : i32
    return %c0_i32, %arg1 : i32, i32
  }
  func.func @transform_4(%arg0: i32, %arg1: i32) -> (i32, i32) {
    %c0_i32 = arith.constant 0 : i32
    %c0_i32_0 = arith.constant 0 : i32
    return %c0_i32, %arg1 : i32, i32
  }
  func.func @transform_5(%arg0: i32, %arg1: i32) -> (i32, i32, i32) {
    %c0_i32 = arith.constant 0 : i32
    %c0_i32_0 = arith.constant 0 : i32
    return %arg0, %c0_i32, %arg1 : i32, i32, i32
  }
}

</mosaic_0001>

<llo_original>
// kernel: tpu_custom_call.1
$region0: #{tpu_custom_call.1}
  #allocation0 [shape = 'u32[]', space=smem, size = 0x4, offset = 0x4, fixed_abs, tag = 'smem constant byte address 0x4 - core index']
  #allocation1 [shape = 'u32[144,128]{1,0:T(1,128)}', space=vmem, size = 0x12000, scoped, tag = 'internal scratch']
  %s0 = inlined_call_operand.vmem [shape: bf16[4,16,12], index: 0, kind: input, shape index: {}]
  %s1 = inlined_call_operand.vmem [shape: s32[4,16,4], index: 1, kind: input, shape index: {}]
  %s2 = inlined_call_operand.vmem [shape: bf16[12,128], index: 2, kind: input, shape index: {}]
  %s3 = inlined_call_operand.vmem [shape: bf16[76,128], index: 3, kind: input, shape index: {}]
  %s4 = inlined_call_operand.vmem [shape: f32[16,128], index: 4, kind: input, shape index: {}]
  %s5 = inlined_call_operand.hbm [shape: f32[4,16,128], index: 5, kind: output, shape index: {}]
  %s6 = sld [smem:[#allocation0]]
  $region53: #{tpu_custom_call.1} parent=0
    _
  %s8 = ssub.s32 1, %s6
  %s9 = scalar_select 0, %s8, %s6
  $region1: #{tpu_custom_call.1} parent=0
    #allocation2 [shape = 'u8[32768]{0}', space=vmem, size = 0x8000, scoped, tag = 'output window, operand 0']
    #allocation3 [shape = 's32[2]{0}', space=sflag, size = 0x8, scoped, tag = 'scoped memory for tpu_custom_call.1']
    %10 = vsyncpa [#allocation3], 0
    %s11 = scalar_lea.sflag [#allocation3], 1
    %12 = vsyncpa %s11, 0
    loop: start=0, step=1, limit=4
    $region2: #{tpu_custom_call.1} parent=1 // loop_pre_header
      _
    $region3: #{tpu_custom_call.1} parent=1 // loop_header
      %s14 = sphi 0, %s18
      %p15 = scmp.ge.s32.totalorder %s14, 4
      %s21 = sphi 0, %s33
      %s22 = sphi 0, %s29
      %s23 = sphi 0, %s21
      %s24 = sphi 0, %s22
      %s25 = sphi 0, %s23
      %s26 = sphi 0, %s24
      %s36 = sphi 0, %s38
      %s39 = sphi 0, %s36
      %s40 = sphi 0, %s39
      %s56 = sphi 0, %s40
      %s62 = sphi 0, %s64
      %s65 = sphi 0, %s62
      %s66 = sphi 0, %s65
      %s82 = sphi 0, %s66
      %s88 = sphi 0, %s90
      %s91 = sphi 0, %s88
      %s92 = sphi 0, %s91
      %s108 = sphi 0, %s92
      %s114 = sphi 0, %s116
      %s117 = sphi 0, %s114
      %s118 = sphi 0, %s117
      %s134 = sphi 0, %s118
      %s140 = sphi 0, %s142
      %s143 = sphi 0, %s140
      %s144 = sphi 0, %s143
      %s160 = sphi 0, %s144
      %s168 = sphi 0, %s170
      %s171 = sphi 0, %s168
      %s172 = sphi 0, %s171
      %s188 = sphi 0, %s172
    $region4: #{tpu_custom_call.1} parent=1 // loop_header_branch
      %17 = sbr.rel (%p15) target = $region8
    $region5: #{tpu_custom_call.1} parent=1 // loop_body
      %s19 = ssub.s32 %s14, 1
      %s20 = ssub.s32 %s14, 2
      %s27 = sadd.s32 1, %s22
      %p28 = scmp.ge.s32.totalorder %s27, 1
      %s29 = scalar_select %p28, 0, %s27
      %s30 = sadd.s32 1, %s21
      %s31 = scalar_select %p28, %s30, %s21
      %p32 = scmp.ge.s32.totalorder %s31, 2
      %s33 = scalar_select %p32, 0, %s31
      %s34 = ssub.s32 %s21, %s33
      %p35 = scmp.eq.s32.totalorder %s34, 0
      %s37 = sadd.s32 %s36, 1
      %s38 = scalar_select %p35, %s36, %s37
      %p41 = pneg %p35
      %p42 = scmp.eq.s32.totalorder %s14, 1
      %p43 = por %p41, %p42
      %p44 = scmp.ne.s32.totalorder %s36, %s39
      %p45 = scmp.eq.s32.totalorder %s14, 0
      %p46 = por %p44, %p45
      %p47 = scmp.ne.s32.totalorder %s36, %s39
      %p48 = scmp.eq.s32.totalorder %s19, 1
      %p49 = por %p47, %p48
      %p50 = scmp.ne.s32.totalorder %s39, %s40
      %p51 = scmp.eq.s32.totalorder %s19, 0
      %p52 = por %p50, %p51
      %p53 = scmp.ne.s32.totalorder %s39, %s40
      %p54 = scmp.eq.s32.totalorder %s20, 1
      %p55 = por %p53, %p54
      %p57 = scmp.ne.s32.totalorder %s40, %s56
      %p58 = scmp.eq.s32.totalorder %s20, 0
      %p59 = por %p57, %p58
      %s60 = ssub.s32 %s21, %s33
      %p61 = scmp.eq.s32.totalorder %s60, 0
      %s63 = sadd.s32 %s62, 1
      %s64 = scalar_select %p61, %s62, %s63
      %p67 = pneg %p61
      %p68 = scmp.eq.s32.totalorder %s14, 1
      %p69 = por %p67, %p68
      %p70 = scmp.ne.s32.totalorder %s62, %s65
      %p71 = scmp.eq.s32.totalorder %s14, 0
      %p72 = por %p70, %p71
      %p73 = scmp.ne.s32.totalorder %s62, %s65
      %p74 = scmp.eq.s32.totalorder %s19, 1
      %p75 = por %p73, %p74
      %p76 = scmp.ne.s32.totalorder %s65, %s66
      %p77 = scmp.eq.s32.totalorder %s19, 0
      %p78 = por %p76, %p77
      %p79 = scmp.ne.s32.totalorder %s65, %s66
      %p80 = scmp.eq.s32.totalorder %s20, 1
      %p81 = por %p79, %p80
      %p83 = scmp.ne.s32.totalorder %s66, %s82
      %p84 = scmp.eq.s32.totalorder %s20, 0
      %p85 = por %p83, %p84
      %s86 = ssub.s32 %s22, %s29
      %p87 = scmp.eq.s32.totalorder %s86, 0
      %s89 = sadd.s32 %s88, 1
      %s90 = scalar_select %p87, %s88, %s89
      %p93 = pneg %p87
      %p94 = scmp.eq.s32.totalorder %s14, 1
      %p95 = por %p93, %p94
      %p96 = scmp.ne.s32.totalorder %s88, %s91
      %p97 = scmp.eq.s32.totalorder %s14, 0
      %p98 = por %p96, %p97
      %p99 = scmp.ne.s32.totalorder %s88, %s91
      %p100 = scmp.eq.s32.totalorder %s19, 1
      %p101 = por %p99, %p100
      %p102 = scmp.ne.s32.totalorder %s91, %s92
      %p103 = scmp.eq.s32.totalorder %s19, 0
      %p104 = por %p102, %p103
      %p105 = scmp.ne.s32.totalorder %s91, %s92
      %p106 = scmp.eq.s32.totalorder %s20, 1
      %p107 = por %p105, %p106
      %p109 = scmp.ne.s32.totalorder %s92, %s108
      %p110 = scmp.eq.s32.totalorder %s20, 0
      %p111 = por %p109, %p110
      %s112 = ssub.s32 %s22, %s29
      %p113 = scmp.eq.s32.totalorder %s112, 0
      %s115 = sadd.s32 %s114, 1
      %s116 = scalar_select %p113, %s114, %s115
      %p119 = pneg %p113
      %p120 = scmp.eq.s32.totalorder %s14, 1
      %p121 = por %p119, %p120
      %p122 = scmp.ne.s32.totalorder %s114, %s117
      %p123 = scmp.eq.s32.totalorder %s14, 0
      %p124 = por %p122, %p123
      %p125 = scmp.ne.s32.totalorder %s114, %s117
      %p126 = scmp.eq.s32.totalorder %s19, 1
      %p127 = por %p125, %p126
      %p128 = scmp.ne.s32.totalorder %s117, %s118
      %p129 = scmp.eq.s32.totalorder %s19, 0
      %p130 = por %p128, %p129
      %p131 = scmp.ne.s32.totalorder %s117, %s118
      %p132 = scmp.eq.s32.totalorder %s20, 1
      %p133 = por %p131, %p132
      %p135 = scmp.ne.s32.totalorder %s118, %s134
      %p136 = scmp.eq.s32.totalorder %s20, 0
      %p137 = por %p135, %p136
      %s138 = ssub.s32 %s22, %s29
      %p139 = scmp.eq.s32.totalorder %s138, 0
      %s141 = sadd.s32 %s140, 1
      %s142 = scalar_select %p139, %s140, %s141
      %p145 = pneg %p139
      %p146 = scmp.eq.s32.totalorder %s14, 1
      %p147 = por %p145, %p146
      %p148 = scmp.ne.s32.totalorder %s140, %s143
      %p149 = scmp.eq.s32.totalorder %s14, 0
      %p150 = por %p148, %p149
      %p151 = scmp.ne.s32.totalorder %s140, %s143
      %p152 = scmp.eq.s32.totalorder %s19, 1
      %p153 = por %p151, %p152
      %p154 = scmp.ne.s32.totalorder %s143, %s144
      %p155 = scmp.eq.s32.totalorder %s19, 0
      %p156 = por %p154, %p155
      %p157 = scmp.ne.s32.totalorder %s143, %s144
      %p158 = scmp.eq.s32.totalorder %s20, 1
      %p159 = por %p157, %p158
      %p161 = scmp.ne.s32.totalorder %s144, %s160
      %p162 = scmp.eq.s32.totalorder %s20, 0
      %p163 = por %p161, %p162
      %s164 = ssub.s32 %s21, %s33
      %s165 = ssub.s32 %s22, %s29
      %s166 = sor.u32 %s164, %s165
      %p167 = scmp.eq.s32.totalorder %s166, 0
      %s169 = sadd.s32 %s168, 1
      %s170 = scalar_select %p167, %s168, %s169
      %p173 = pneg %p167
      %p174 = scmp.eq.s32.totalorder %s14, 1
      %p175 = por %p173, %p174
      %p176 = scmp.ne.s32.totalorder %s168, %s171
      %p177 = scmp.eq.s32.totalorder %s14, 0
      %p178 = por %p176, %p177
      %p179 = scmp.ne.s32.totalorder %s168, %s171
      %p180 = scmp.eq.s32.totalorder %s19, 1
      %p181 = por %p179, %p180
      %p182 = scmp.ne.s32.totalorder %s171, %s172
      %p183 = scmp.eq.s32.totalorder %s19, 0
      %p184 = por %p182, %p183
      %p185 = scmp.ne.s32.totalorder %s171, %s172
      %p186 = scmp.eq.s32.totalorder %s20, 1
      %p187 = por %p185, %p186
      %p189 = scmp.ne.s32.totalorder %s172, %s188
      %p190 = scmp.eq.s32.totalorder %s20, 0
      %p191 = por %p189, %p190
      %p192 = scmp.le.s32.totalorder 1, %s14
      %p193 = scmp.lt.s32.totalorder %s14, 3
      %p194 = pnand %p192, %p193
      %p195 = pneg %p194
      // Predicated region
      $region9: #{tpu_custom_call.1} parent=5 // pred_check
        _
      $region10: #{tpu_custom_call.1} parent=5 // pred_check_branch
        %197 = sbr.rel (%p194) target = $region12
      $region11: #{tpu_custom_call.1} parent=5 // pred_region
        %s198 = ssub.s32 %s14, 1
        // Predicated region
        $region13: #{tpu_custom_call.1} parent=11 // pred_check
          %p199 = pneg %p104
        $region14: #{tpu_custom_call.1} parent=11 // pred_check_branch
          %201 = sbr.rel (%p199) target = $region16
        $region15: #{tpu_custom_call.1} parent=11 // pred_region
          %p202 = scmp.lt.s32.totalorder %s24, 0
          %s203 = scalar_select %p202, %s24, 0
          %s204 = smul.addr %s203, 4
          %s205 = scalar_lea.vmem %s2, %s204
        $region16: #{tpu_custom_call.1} parent=11 // pred_fallthru
          _
        // Predicated region
        $region17: #{tpu_custom_call.1} parent=11 // pred_check
          %p206 = pneg %p130
        $region18: #{tpu_custom_call.1} parent=11 // pred_check_branch
          %208 = sbr.rel (%p206) target = $region20
        $region19: #{tpu_custom_call.1} parent=11 // pred_region
          %p209 = scmp.lt.s32.totalorder %s24, 0
          %s210 = scalar_select %p209, %s24, 0
          %s211 = smul.addr %s210, 4
          %s212 = scalar_lea.vmem %s3, %s211
        $region20: #{tpu_custom_call.1} parent=11 // pred_fallthru
          _
        // Predicated region
        $region21: #{tpu_custom_call.1} parent=11 // pred_check
          %p213 = pneg %p156
        $region22: #{tpu_custom_call.1} parent=11 // pred_check_branch
          %215 = sbr.rel (%p213) target = $region24
        $region23: #{tpu_custom_call.1} parent=11 // pred_region
          %p216 = scmp.lt.s32.totalorder %s24, 0
          %s217 = scalar_select %p216, %s24, 0
          %s218 = smul.addr %s217, 8
          %s219 = scalar_lea.vmem %s4, %s218
        $region24: #{tpu_custom_call.1} parent=11 // pred_fallthru
          _
      $region12: #{tpu_custom_call.1} parent=5 // pred_fallthru
        _
      %p220 = scmp.lt.s32.totalorder %s14, 2
      // Predicated region
      $region25: #{tpu_custom_call.1} parent=5 // pred_check
        %p221 = pneg %p220
      $region26: #{tpu_custom_call.1} parent=5 // pred_check_branch
        %223 = sbr.rel (%p221) target = $region28
      $region27: #{tpu_custom_call.1} parent=5 // pred_region
        // Predicated region
        $region29: #{tpu_custom_call.1} parent=27 // pred_check
          %p224 = pneg %p46
        $region30: #{tpu_custom_call.1} parent=27 // pred_check_branch
          %226 = sbr.rel (%p224) target = $region32
        $region31: #{tpu_custom_call.1} parent=27 // pred_region
          %s227 = smul.u32 2, %s21
          %p228 = scmp.lt.s32.totalorder %s227, 3
          %s229 = scalar_select %p228, %s227, 3
          %s230 = smul.addr %s229, 2
          %s231 = smul.addr %s230, 4
          %s232 = scalar_lea.vmem %s0, %s231
          %s233 = smul.u32 2, %s21
        $region32: #{tpu_custom_call.1} parent=27 // pred_fallthru
          _
        // Predicated region
        $region33: #{tpu_custom_call.1} parent=27 // pred_check
          %p234 = pneg %p72
        $region34: #{tpu_custom_call.1} parent=27 // pred_check_branch
          %236 = sbr.rel (%p234) target = $region36
        $region35: #{tpu_custom_call.1} parent=27 // pred_region
          %s237 = smul.u32 2, %s21
          %p238 = scmp.lt.s32.totalorder %s237, 3
          %s239 = scalar_select %p238, %s237, 3
          %s240 = smul.addr %s239, 2
          %s241 = smul.addr %s240, 8
          %s242 = scalar_lea.vmem %s1, %s241
          %s243 = smul.u32 2, %s21
        $region36: #{tpu_custom_call.1} parent=27 // pred_fallthru
          _
      $region28: #{tpu_custom_call.1} parent=5 // pred_fallthru
        _
      %p244 = scmp.le.s32.totalorder 1, %s14
      %p245 = scmp.lt.s32.totalorder %s14, 3
      %p246 = pnand %p244, %p245
      %p247 = pneg %p246
      // Predicated region
      $region37: #{tpu_custom_call.1} parent=5 // pred_check
        _
      $region38: #{tpu_custom_call.1} parent=5 // pred_check_branch
        %249 = sbr.rel (%p246) target = $region40
      $region39: #{tpu_custom_call.1} parent=5 // pred_region
        %s250 = ssub.s32 %s14, 1
        %s251 = smul.u32 2, %s23
        %p252 = scmp.lt.s32.totalorder %s251, 3
        %s253 = scalar_select %p252, %s251, 3
        %s254 = smul.addr %s253, 2
        %s255 = smul.addr %s254, 4
        %s256 = scalar_lea.vmem %s0, %s255
        %p257 = pneg %p52
        %p258 = pneg %p49
        %s259 = smul.u32 2, %s23
        %p260 = scmp.lt.s32.totalorder %s259, 3
        %s261 = scalar_select %p260, %s259, 3
        %s262 = smul.addr %s261, 2
        %s263 = smul.addr %s262, 8
        %s264 = scalar_lea.vmem %s1, %s263
        %p265 = pneg %p78
        %p266 = pneg %p75
        %p267 = scmp.lt.s32.totalorder %s24, 0
        %s268 = scalar_select %p267, %s24, 0
        %s269 = smul.addr %s268, 4
        %s270 = scalar_lea.vmem %s2, %s269
        %p271 = pneg %p104
        %p272 = pneg %p101
        %p273 = scmp.lt.s32.totalorder %s24, 0
        %s274 = scalar_select %p273, %s24, 0
        %s275 = smul.addr %s274, 4
        %s276 = scalar_lea.vmem %s3, %s275
        %p277 = pneg %p130
        %p278 = pneg %p127
        %p279 = scmp.lt.s32.totalorder %s24, 0
        %s280 = scalar_select %p279, %s24, 0
        %s281 = smul.addr %s280, 8
        %s282 = scalar_lea.vmem %s4, %s281
        %p283 = pneg %p156
        %p284 = pneg %p153
        %p285 = pneg %p184
        %p286 = pneg %p181
        %s287 = sand.u32 %s171, 1
        %s288 = scalar_lea.sflag [#allocation3], %s287
        %s289 = sand.u32 %s171, 1
        %s290 = smul.addr %s289, 32
        %s291 = scalar_lea.vmem [#allocation2], %s290
        %s292 = smul.u32 2, %s23
        %p293 = scmp.lt.s32.totalorder %s292, 3
        %s294 = scalar_select %p293, %s292, 3
        %s295 = smul.addr %s294, 2
        %s296 = smul.addr %s295, 4
        %s297 = scalar_lea.vmem %s0, %s296
        %s298 = smul.u32 2, %s23
        %s299 = smul.u32 2, %s23
        %p300 = scmp.lt.s32.totalorder %s299, 3
        %s301 = scalar_select %p300, %s299, 3
        %s302 = smul.addr %s301, 2
        %s303 = smul.addr %s302, 8
        %s304 = scalar_lea.vmem %s1, %s303
        %s305 = smul.u32 2, %s23
        %p306 = scmp.lt.s32.totalorder %s24, 0
        %s307 = scalar_select %p306, %s24, 0
        %s308 = smul.addr %s307, 4
        %s309 = scalar_lea.vmem %s2, %s308
        %p310 = scmp.lt.s32.totalorder %s24, 0
        %s311 = scalar_select %p310, %s24, 0
        %s312 = smul.addr %s311, 4
        %s313 = scalar_lea.vmem %s3, %s312
        %p314 = scmp.lt.s32.totalorder %s24, 0
        %s315 = scalar_select %p314, %s24, 0
        %s316 = smul.addr %s315, 8
        %s317 = scalar_lea.vmem %s4, %s316
        %s318 = smul.u32 2, %s23
        %v320 = vld [vmem:[%s297] sm:$0xf]
        %v321 = vld [vmem:[%s297 + $0x4] sm:$0xf]
        %v322 = vld [vmem:[%s297 + $0x8] sm:$0xf]
        %v323 = vld [vmem:[%s297 + $0xc] sm:$0xf]
        %v324 = vld [vmem:[%s309] sm:$0xf]
        %v325 = vld [vmem:[%s309 + $0x4] sm:$0x3]
        %v326 = vld [vmem:[%s304] sm:$0xff]
        %v327 = vld [vmem:[%s304 + $0x8] sm:$0xff]
        %v328 = vld [vmem:[%s304 + $0x10] sm:$0xff]
        %v329 = vld [vmem:[%s304 + $0x18] sm:$0xff]
        %v330 = vlaneseq
        %v331 = vand.u32 %v330, 127
        %332 = vset.pattern.permute.xlu0 0
        %333 = vperm.xlu0 %332, %v326
        %v334 = vpop.permute.xlu0 %333
        %335 = vset.pattern.permute.xlu0 0
        %336 = vperm.xlu0 %335, %v327
        %v337 = vpop.permute.xlu0 %336
        %338 = vset.pattern.permute.xlu0 0
        %339 = vperm.xlu0 %338, %v328
        %v340 = vpop.permute.xlu0 %339
        %341 = vset.pattern.permute.xlu0 0
        %342 = vperm.xlu0 %341, %v329
        %v343 = vpop.permute.xlu0 %342
        %vm344 = vcmp.eq.s32.totalorder %v331, %v334
        %vm345 = vcmp.eq.s32.totalorder %v331, %v337
        %vm346 = vcmp.eq.s32.totalorder %v331, %v340
        %vm347 = vcmp.eq.s32.totalorder %v331, %v343
        %v348 = vsel %vm344, 1, 0
        %v349 = vsel %vm345, 1, 0
        %v350 = vsel %vm346, 1, 0
        %v351 = vsel %vm347, 1, 0
        %v352 = vcvt.s32.f32 %v348
        %v353 = vcvt.s32.f32 %v349
        %v354 = vcvt.s32.f32 %v350
        %v355 = vcvt.s32.f32 %v351
        %v356 = vadd.f32 %v352, 0.0
        %v357 = vadd.f32 %v353, 0.0
        %v358 = vadd.f32 %v354, 0.0
        %v359 = vadd.f32 %v355, 0.0
        %360 = vset.pattern.permute.xlu0 1
        %361 = vperm.xlu0 %360, %v326
        %v362 = vpop.permute.xlu0 %361
        %363 = vset.pattern.permute.xlu0 1
        %364 = vperm.xlu0 %363, %v327
        %v365 = vpop.permute.xlu0 %364
        %366 = vset.pattern.permute.xlu0 1
        %367 = vperm.xlu0 %366, %v328
        %v368 = vpop.permute.xlu0 %367
        %369 = vset.pattern.permute.xlu0 1
        %370 = vperm.xlu0 %369, %v329
        %v371 = vpop.permute.xlu0 %370
        %vm372 = vcmp.eq.s32.totalorder %v331, %v362
        %vm373 = vcmp.eq.s32.totalorder %v331, %v365
        %vm374 = vcmp.eq.s32.totalorder %v331, %v368
        %vm375 = vcmp.eq.s32.totalorder %v331, %v371
        %v376 = vsel %vm372, 1, 0
        %v377 = vsel %vm373, 1, 0
        %v378 = vsel %vm374, 1, 0
        %v379 = vsel %vm375, 1, 0
        %v380 = vcvt.s32.f32 %v376
        %v381 = vcvt.s32.f32 %v377
        %v382 = vcvt.s32.f32 %v378
        %v383 = vcvt.s32.f32 %v379
        %v384 = vadd.f32 %v356, %v380
        %v385 = vadd.f32 %v357, %v381
        %v386 = vadd.f32 %v358, %v382
        %v387 = vadd.f32 %v359, %v383
        %388 = vset.pattern.permute.xlu0 2
        %389 = vperm.xlu0 %388, %v326
        %v390 = vpop.permute.xlu0 %389
        %391 = vset.pattern.permute.xlu0 2
        %392 = vperm.xlu0 %391, %v327
        %v393 = vpop.permute.xlu0 %392
        %394 = vset.pattern.permute.xlu0 2
        %395 = vperm.xlu0 %394, %v328
        %v396 = vpop.permute.xlu0 %395
        %397 = vset.pattern.permute.xlu0 2
        %398 = vperm.xlu0 %397, %v329
        %v399 = vpop.permute.xlu0 %398
        %vm400 = vcmp.eq.s32.totalorder %v331, %v390
        %vm401 = vcmp.eq.s32.totalorder %v331, %v393
        %vm402 = vcmp.eq.s32.totalorder %v331, %v396
        %vm403 = vcmp.eq.s32.totalorder %v331, %v399
        %v404 = vsel %vm400, 1, 0
        %v405 = vsel %vm401, 1, 0
        %v406 = vsel %vm402, 1, 0
        %v407 = vsel %vm403, 1, 0
        %v408 = vcvt.s32.f32 %v404
        %v409 = vcvt.s32.f32 %v405
        %v410 = vcvt.s32.f32 %v406
        %v411 = vcvt.s32.f32 %v407
        %v412 = vadd.f32 %v384, %v408
        %v413 = vadd.f32 %v385, %v409
        %v414 = vadd.f32 %v386, %v410
        %v415 = vadd.f32 %v387, %v411
        %416 = vset.pattern.permute.xlu0 3
        %417 = vperm.xlu0 %416, %v326
        %v418 = vpop.permute.xlu0 %417
        %419 = vset.pattern.permute.xlu0 3
        %420 = vperm.xlu0 %419, %v327
        %v421 = vpop.permute.xlu0 %420
        %422 = vset.pattern.permute.xlu0 3
        %423 = vperm.xlu0 %422, %v328
        %v424 = vpop.permute.xlu0 %423
        %425 = vset.pattern.permute.xlu0 3
        %426 = vperm.xlu0 %425, %v329
        %v427 = vpop.permute.xlu0 %426
        %vm428 = vcmp.eq.s32.totalorder %v331, %v418
        %vm429 = vcmp.eq.s32.totalorder %v331, %v421
        %vm430 = vcmp.eq.s32.totalorder %v331, %v424
        %vm431 = vcmp.eq.s32.totalorder %v331, %v427
        %v432 = vsel %vm428, 1, 0
        %v433 = vsel %vm429, 1, 0
        %v434 = vsel %vm430, 1, 0
        %v435 = vsel %vm431, 1, 0
        %v436 = vcvt.s32.f32 %v432
        %v437 = vcvt.s32.f32 %v433
        %v438 = vcvt.s32.f32 %v434
        %v439 = vcvt.s32.f32 %v435
        %v440 = vadd.f32 %v412, %v436
        %v441 = vadd.f32 %v413, %v437
        %v442 = vadd.f32 %v414, %v438
        %v443 = vadd.f32 %v415, %v439
        %v444 = vpack.c.bf16 %v441, %v440
        %v445 = vpack.c.bf16 %v443, %v442
        %v446 = vld [vmem:[%s313] sm:$0xf]
        %v447 = vld [vmem:[%s313 + $0x4] sm:$0xf]
        %v448 = vld [vmem:[%s313 + $0x8] sm:$0xf]
        %v449 = vld [vmem:[%s313 + $0xc] sm:$0xf]
        %v450 = vld [vmem:[%s313 + $0x10] sm:$0xf]
        %v451 = vld [vmem:[%s313 + $0x14] sm:$0xf]
        %v452 = vld [vmem:[%s313 + $0x18] sm:$0xf]
        %v453 = vld [vmem:[%s313 + $0x1c] sm:$0xf]
        %v454 = vld [vmem:[%s313 + $0x20] sm:$0xf]
        %v455 = vld [vmem:[%s313 + $0x24] sm:$0x3]
        %v466 = vunpack.c.l.b16 %v446
        %v467 = vunpack.c.l.b16 %v447
        %v468 = vunpack.c.l.b16 %v448
        %v469 = vunpack.c.l.b16 %v449
        %v470 = vunpack.c.l.b16 %v450
        %v471 = vunpack.c.l.b16 %v451
        %v472 = vunpack.c.l.b16 %v452
        %v473 = vunpack.c.l.b16 %v453
        %v474 = vunpack.c.l.b16 %v454
        %v475 = vunpack.c.l.b16 %v455
        %v476 = vpack.c.b16 %v467, %v466
        %v477 = vpack.c.b16 %v469, %v468
        %v478 = vpack.c.b16 %v471, %v470
        %v479 = vpack.c.b16 %v473, %v472
        %v480 = vpack.c.b16 %v475, %v474
        %vm485 = vcmask 621568
        %v487 = vsel %vm485, %v444, 0
        %v490 = vsel %vm485, %v445, 0
        %vm492 = vcmask 1045504
        %v494 = vsel %vm492, %v480, 0
        %496 = vmatprep.subr.bf16.mxu0 0
        %497 = vmatpush1.bf16.msra.mxu0 0
        %498 = vmatprep.subr.bf16.mxu0 0
        %499 = vmatpush1.bf16.msra.mxu0 0
        %500 = vmatprep.subr.bf16.mxu0 0
        %501 = vmatpush1.bf16.msra.mxu0 0
        %502 = vmatprep.subr.bf16.mxu0 0
        %503 = vmatpush1.bf16.msra.mxu0 %v494
        %504 = vmatprep.subr.bf16.mxu0 0
        %505 = vmatpush1.bf16.msra.mxu0 %v479
        %506 = vmatprep.subr.bf16.mxu0 0
        %507 = vmatpush1.bf16.msra.mxu0 %v478
        %508 = vmatprep.subr.bf16.mxu0 0
        %509 = vmatpush1.bf16.msra.mxu0 %v477
        %510 = vmatprep.subr.bf16.mxu0 0
        %511 = vmatpush1.bf16.msra.mxu0 %v476
        %512 = vmatprep.subr.bf16.mxu0 0
        %513 = vmatpush2.bf16.msra.mxu0 0
        %514 = vmatprep.subr.bf16.mxu0 0
        %515 = vmatpush2.bf16.msra.mxu0 0
        %516 = vmatprep.subr.bf16.mxu0 0
        %517 = vmatpush2.bf16.msra.mxu0 0
        %518 = vmatprep.subr.bf16.mxu0 0
        %519 = vmatpush2.bf16.msra.mxu0 0
        %520 = vmatprep.subr.bf16.mxu0 0
        %521 = vmatpush2.bf16.msra.mxu0 0
        %522 = vmatprep.subr.bf16.mxu0 0
        %523 = vmatpush2.bf16.msra.mxu0 0
        %524 = vmatprep.subr.bf16.mxu0 0
        %525 = vmatpush2.bf16.msra.mxu0 0
        %526 = vmatprep.subr.bf16.mxu0 0
        %527 = vmatpush2.bf16.msra.mxu0 0
        %528 = vmatprep.mubr.bf16.mxu0 0
        %529 = vmatmul.mubr.bf16.gmra.mxu0 %v487
        %v530 = vpop.f32.mrf.mxu0
        %v531 = vadd.f32 0.0, %v530
        %v532 = vpop.f32.mrf.mxu0
        %v533 = vpop.f32.mrf.mxu0
        %v534 = vadd.f32 0.0, %v533
        %v535 = vpop.f32.mrf.mxu0
        %536 = vmatprep.mubr.bf16.mxu0 0
        %537 = vmatmul.mubr.bf16.gmra.mxu0 %v490
        %v538 = vpop.f32.mrf.mxu0
        %v539 = vadd.f32 0.0, %v538
        %v540 = vpop.f32.mrf.mxu0
        %v541 = vpop.f32.mrf.mxu0
        %v542 = vadd.f32 0.0, %v541
        %v543 = vpop.f32.mrf.mxu0
        %544 = vdwg.mxu0
        %v549 = vunpack.c.l.b16 %v320
        %v550 = vunpack.c.l.b16 %v321
        %v551 = vunpack.c.l.b16 %v322
        %v552 = vunpack.c.l.b16 %v323
        %v553 = vpack.c.b16 %v550, %v549
        %v554 = vpack.c.b16 %v552, %v551
        %v557 = vunpack.c.l.b16 %v324
        %v558 = vunpack.c.l.b16 %v325
        %v559 = vpack.c.b16 %v558, %v557
        %vm560 = vcmask 97280
        %v562 = vsel %vm560, %v553, 0
        %v565 = vsel %vm560, %v554, 0
        %v568 = vsel %vm492, %v559, 0
        %570 = vmatprep.subr.bf16.mxu0 0
        %571 = vmatpush1.bf16.msra.mxu0 0
        %572 = vmatprep.subr.bf16.mxu0 0
        %573 = vmatpush1.bf16.msra.mxu0 0
        %574 = vmatprep.subr.bf16.mxu0 0
        %575 = vmatpush1.bf16.msra.mxu0 0
        %576 = vmatprep.subr.bf16.mxu0 0
        %577 = vmatpush1.bf16.msra.mxu0 0
        %578 = vmatprep.subr.bf16.mxu0 0
        %579 = vmatpush1.bf16.msra.mxu0 0
        %580 = vmatprep.subr.bf16.mxu0 0
        %581 = vmatpush1.bf16.msra.mxu0 0
        %582 = vmatprep.subr.bf16.mxu0 0
        %583 = vmatpush1.bf16.msra.mxu0 0
        %584 = vmatprep.subr.bf16.mxu0 0
        %585 = vmatpush1.bf16.msra.mxu0 %v568
        %586 = vmatprep.subr.bf16.mxu0 0
        %587 = vmatpush2.bf16.msra.mxu0 0
        %588 = vmatprep.subr.bf16.mxu0 0
        %589 = vmatpush2.bf16.msra.mxu0 0
        %590 = vmatprep.subr.bf16.mxu0 0
        %591 = vmatpush2.bf16.msra.mxu0 0
        %592 = vmatprep.subr.bf16.mxu0 0
        %593 = vmatpush2.bf16.msra.mxu0 0
        %594 = vmatprep.subr.bf16.mxu0 0
        %595 = vmatpush2.bf16.msra.mxu0 0
        %596 = vmatprep.subr.bf16.mxu0 0
        %597 = vmatpush2.bf16.msra.mxu0 0
        %598 = vmatprep.subr.bf16.mxu0 0
        %599 = vmatpush2.bf16.msra.mxu0 0
        %600 = vmatprep.subr.bf16.mxu0 0
        %601 = vmatpush2.bf16.msra.mxu0 0
        %602 = vmatprep.mubr.bf16.mxu0 0
        %603 = vmatmul.mubr.bf16.gmra.mxu0 %v562
        %v604 = vpop.f32.mrf.mxu0
        %v605 = vadd.f32 %v531, %v604
        %v606 = vpop.f32.mrf.mxu0
        %v607 = vpop.f32.mrf.mxu0
        %v608 = vadd.f32 %v534, %v607
        %v609 = vpop.f32.mrf.mxu0
        %610 = vmatprep.mubr.bf16.mxu0 0
        %611 = vmatmul.mubr.bf16.gmra.mxu0 %v565
        %v612 = vpop.f32.mrf.mxu0
        %v613 = vadd.f32 %v539, %v612
        %v614 = vpop.f32.mrf.mxu0
        %v615 = vpop.f32.mrf.mxu0
        %v616 = vadd.f32 %v542, %v615
        %v617 = vpop.f32.mrf.mxu0
        %618 = vdwg.mxu0
        %v619 = vld [vmem:[%s317] sm:$0xff]
        %v620 = vld [vmem:[%s317 + $0x8] sm:$0xff]
        %v621 = vadd.f32 %v605, %v619
        %v622 = vadd.f32 %v608, %v620
        %v623 = vadd.f32 %v613, %v619
        %v624 = vadd.f32 %v616, %v620
        %625 = vst [vmem:[%s291] sm:$0xff] %v621
        %626 = vst [vmem:[%s291 + $0x8] sm:$0xff] %v622
        %627 = vst [vmem:[%s291 + $0x10] sm:$0xff] %v623
        %628 = vst [vmem:[%s291 + $0x18] sm:$0xff] %v624
        %s629 = sand.u32 %s171, 1
        %s630 = scalar_lea.sflag [#allocation3], %s629
        %s631 = sand.u32 %s171, 1
        %s632 = smul.addr %s631, 32
        %s633 = scalar_lea.vmem [#allocation2], %s632
        // Predicated region
        $region41: #{tpu_custom_call.1} parent=39 // pred_check
          %p634 = pneg %p181
        $region42: #{tpu_custom_call.1} parent=39 // pred_check_branch
          %636 = sbr.rel (%p634) target = $region44
        $region43: #{tpu_custom_call.1} parent=39 // pred_region
          %s637 = smul.u32 2, %s23
          %s639 = ssub.s32 512, 512
          %640 = vsyncadd %s630, %s639
          %s641 = smul.addr %s637, 2
          %s642 = sadd.s32 %s24, %s641
          %s643 = smul.addr %s642, 128
          %s644 = scalar_lea.hbm %s5, %s643
          %s645 = sshll.u32 %s633, 4
          %s646 = int_to_ptr.vmem [resolvable:$true] %s645
          %651 = dma.vmem_to_hbm [thread:$0]  %s646, 512, %s644, %s630, 128, 128, 8
        $region44: #{tpu_custom_call.1} parent=39 // pred_fallthru
          _
      $region40: #{tpu_custom_call.1} parent=5 // pred_fallthru
        _
      %p652 = scmp.le.s32.totalorder 2, %s14
      // Predicated region
      $region45: #{tpu_custom_call.1} parent=5 // pred_check
        %p653 = pneg %p652
      $region46: #{tpu_custom_call.1} parent=5 // pred_check_branch
        %655 = sbr.rel (%p653) target = $region48
      $region47: #{tpu_custom_call.1} parent=5 // pred_region
        %s656 = ssub.s32 %s14, 2
        // Predicated region
        $region49: #{tpu_custom_call.1} parent=47 // pred_check
          %p657 = pneg %p187
        $region50: #{tpu_custom_call.1} parent=47 // pred_check_branch
          %659 = sbr.rel (%p657) target = $region52
        $region51: #{tpu_custom_call.1} parent=47 // pred_region
          %s660 = sand.u32 %s172, 1
          %s661 = scalar_lea.sflag [#allocation3], %s660
          %s662 = sand.u32 %s172, 1
          %s663 = smul.addr %s662, 32
          %s664 = scalar_lea.vmem [#allocation2], %s663
          %665 = dma.done %s661, 512
        $region52: #{tpu_custom_call.1} parent=47 // pred_fallthru
          _
      $region48: #{tpu_custom_call.1} parent=5 // pred_fallthru
        _
    $region6: #{tpu_custom_call.1} parent=1 // loop_footer
      %s18 = sadd.s32 1, %s14
    $region7: #{tpu_custom_call.1} parent=1 // loop_footer_branch
      %13 = sbr.rel target = $region3
    $region8: #{tpu_custom_call.1} parent=1 // loop_exit
      _
    %666 = vsyncpa [#allocation3], 1
    %s667 = scalar_lea.sflag [#allocation3], 1
    %668 = vsyncpa %s667, 1

</llo_original>
